<compile_context>
chip_gen: v7x
topology: tpu7x:2x2x1
jax: 0.10.0
libtpu: 0.0.40
codegen_flags: <defaults>
</compile_context>

<pallas_src>
import math

import jax
import jax.numpy as jnp
from jax.experimental import pallas as pl
from jax.experimental.pallas import tpu as pltpu


def _span_finder_kernel(xi_ref, xj_ref, mrow_ref, mcol_ref, o_ref):
    # xi_ref:   (TM, D)   span-start endpoint states (row tile)
    # xj_ref:   (TN, D)   span-end endpoint states   (col tile)
    # mrow_ref: (TM, 1)   start-position validity (0./1.)
    # mcol_ref: (1, TN)   end-position validity   (0./1.)
    # o_ref:    (TM, TN)  span scores for this (start, end) tile
    i = pl.program_id(1)
    j = pl.program_id(2)
    TM, TN = o_ref.shape
    row0 = i * TM
    col0 = j * TN

    # A tile is pure fill if every end index is strictly below every start
    # index (fully under the diagonal): skip the MXU work there.
    tile_touches_diag = col0 + (TN - 1) >= row0

    @pl.when(tile_touches_diag)
    def _compute():
        # Contract the trailing feature dim of both operands directly; no
        # transposed copy of the column tile is materialized in VMEM.
        s = jax.lax.dot_general(
            xi_ref[...], xj_ref[...],
            dimension_numbers=(((1,), (1,)), ((), ())),
            preferred_element_type=jnp.float32)                  # (TM, TN)

        row = row0 + jax.lax.broadcasted_iota(jnp.int32, (TM, TN), 0)
        col = col0 + jax.lax.broadcasted_iota(jnp.int32, (TM, TN), 1)

        start_valid = mrow_ref[...] > 0.5                        # (TM, 1)
        end_valid = mcol_ref[...] > 0.5                          # (1, TN)
        valid = (col >= row) & start_valid & end_valid

        o_ref[...] = jnp.where(valid, s, jnp.float32(-1e9))

    @pl.when(jnp.logical_not(tile_touches_diag))
    def _fill():
        o_ref[...] = jnp.full((TM, TN), -1e9, dtype=o_ref.dtype)


def span_finder_forward(sequence_tensor, sequence_mask, *, tm=256, tn=512):
    """sequence_tensor: [B, T, D] (f32 or bf16), sequence_mask: [B, T] (0/1)."""
    B, T, D = sequence_tensor.shape

    # Tile selection: full-extent blocks for small T (always layout-legal);
    # (8,128)-aligned tiles otherwise.  256x512 f32 output tiles are ~512 KiB
    # (1 MiB double-buffered) -> comfortably inside default scoped VMEM on
    # v5e/v6e and v7x's smaller 64 MiB VMEM.
    if T <= max(tm, tn):
        TM = TN = T
        Tp = T
    else:
        TM, TN = tm, tn
        step = TM * TN // math.gcd(TM, TN)
        Tp = ((T + step - 1) // step) * step

    x = sequence_tensor                      # keep caller dtype (bf16 stays bf16)
    m = sequence_mask
    if Tp != T:
        x = jnp.pad(x, ((0, 0), (0, Tp - T), (0, 0)))
        m = jnp.pad(m, ((0, 0), (0, Tp - T)))   # padded positions -> invalid

    mf = m.astype(jnp.float32)
    mrow = mf.reshape(B, Tp, 1)              # start validity, (TM, 1) tiles
    mcol = mf.reshape(B, 1, Tp)              # end validity,   (1, TN) tiles

    grid = (B, Tp // TM, Tp // TN)

    scores = pl.pallas_call(
        _span_finder_kernel,
        out_shape=jax.ShapeDtypeStruct((B, Tp, Tp), jnp.float32),
        grid_spec=pltpu.PrefetchScalarGridSpec(
            num_scalar_prefetch=0,
            grid=grid,
            in_specs=[
                pl.BlockSpec((None, TM, D), lambda b, i, j: (b, i, 0)),   # row x
                pl.BlockSpec((None, TN, D), lambda b, i, j: (b, j, 0)),   # col x
                pl.BlockSpec((None, TM, 1), lambda b, i, j: (b, i, 0)),   # row mask
                pl.BlockSpec((None, 1, TN), lambda b, i, j: (b, 0, j)),   # col mask
            ],
            out_specs=pl.BlockSpec((None, TM, TN), lambda b, i, j: (b, i, j)),
        ),
        compiler_params=pltpu.CompilerParams(
            dimension_semantics=("parallel", "parallel", "parallel"),
        ),
    )(x, x, mrow, mcol)

    if Tp != T:
        scores = scores[:, :T, :T]
    return {"span_scores": scores}


def _reference(sequence_tensor, sequence_mask):
    T = sequence_tensor.shape[1]
    xf = sequence_tensor.astype(jnp.float32)
    s = jnp.einsum("btd,bsd->bts", xf, xf)
    row = jnp.arange(T)[:, None]
    col = jnp.arange(T)[None, :]
    valid = ((col >= row)[None]
             & (sequence_mask[:, :, None] > 0)
             & (sequence_mask[:, None, :] > 0))
    return jnp.where(valid, s, -1e9)


if __name__ == "__main__":
    key = jax.random.PRNGKey(0)
    k1, k2 = jax.random.split(key)

    # --- Small shapes consistent with the module (input_dim = 32). ---
    B, T, D = 2, 8, 32
    sequence_tensor = jax.random.normal(k1, (B, T, D), dtype=jnp.float32)
    sequence_mask = jnp.array(
        [[1, 1, 1, 1, 1, 1, 1, 1],
         [1, 1, 1, 1, 1, 0, 0, 0]], dtype=jnp.int32)

    out = span_finder_forward(sequence_tensor, sequence_mask)
    jax.block_until_ready(out["span_scores"])
    ref = _reference(sequence_tensor, sequence_mask)
    assert jnp.allclose(out["span_scores"], ref, atol=1e-4, rtol=1e-4)

    # --- Larger T to exercise the tiled / diagonal-skipping path. ---
    B2, T2, D2 = 2, 256, 32
    x2 = jax.random.normal(k2, (B2, T2, D2), dtype=jnp.float32)
    m2 = (jnp.arange(T2)[None, :] < jnp.array([[256], [190]])).astype(jnp.int32)
    out2 = span_finder_forward(x2, m2, tm=64, tn=128)
    jax.block_until_ready(out2["span_scores"])
    ref2 = _reference(x2, m2)
    assert jnp.allclose(out2["span_scores"], ref2, atol=1e-3, rtol=1e-4)

    print("KERNEL_OK")
</pallas_src>

<mosaic_0001>
module attributes {stable_mosaic.version = 11 : i64} {
  func.func @_span_finder_kernel(%arg0: i32, %arg1: i32, %arg2: i32, %arg3: memref<1x8x32xf32, #tpu.memory_space<vmem>>, %arg4: memref<1x8x32xf32, #tpu.memory_space<vmem>>, %arg5: memref<1x8x1xf32, #tpu.memory_space<vmem>>, %arg6: memref<1x1x8xf32, #tpu.memory_space<vmem>>, %arg7: memref<1x8x8xf32, #tpu.memory_space<vmem>>) attributes {dimension_semantics = [#tpu.dimension_semantics<parallel>, #tpu.dimension_semantics<parallel>, #tpu.dimension_semantics<parallel>], iteration_bounds = array<i64: 2, 1, 1>, scalar_prefetch = 0 : i64, scratch_operands = 0 : i64, tpu.core_type = #tpu.core_type<tc>, window_params = [{transform_indices = @transform_0, window_bounds = array<i64: 1, 8, 32>}, {transform_indices = @transform_1, window_bounds = array<i64: 1, 8, 32>}, {transform_indices = @transform_2, window_bounds = array<i64: 1, 8, 1>}, {transform_indices = @transform_3, window_bounds = array<i64: 1, 1, 8>}, {transform_indices = @transform_4, window_bounds = array<i64: 1, 8, 8>}]} {
    %c8_i32 = arith.constant 8 : i32
    %0 = arith.muli %arg1, %c8_i32 : i32
    %c8_i32_0 = arith.constant 8 : i32
    %1 = arith.muli %arg2, %c8_i32_0 : i32
    %c7_i32 = arith.constant 7 : i32
    %2 = arith.addi %1, %c7_i32 : i32
    %3 = arith.cmpi sge, %2, %0 : i32
    %4 = arith.extui %3 : i1 to i32
    %c0_i32 = arith.constant 0 : i32
    %5 = arith.cmpi ne, %4, %c0_i32 : i32
    scf.if %5 {
      %c0 = arith.constant 0 : index
      %c0_2 = arith.constant 0 : index
      %c0_3 = arith.constant 0 : index
      %9 = vector.load %arg3[%c0, %c0_2, %c0_3] : memref<1x8x32xf32, #tpu.memory_space<vmem>>, vector<1x8x32xf32>
      %10 = vector.shape_cast %9 : vector<1x8x32xf32> to vector<8x32xf32>
      %c0_4 = arith.constant 0 : index
      %c0_5 = arith.constant 0 : index
      %c0_6 = arith.constant 0 : index
      %11 = vector.load %arg4[%c0_4, %c0_5, %c0_6] : memref<1x8x32xf32, #tpu.memory_space<vmem>>, vector<1x8x32xf32>
      %12 = vector.shape_cast %11 : vector<1x8x32xf32> to vector<8x32xf32>
      %cst = arith.constant dense<0.000000e+00> : vector<8x8xf32>
      %13 = tpu.matmul %10, %12, %cst {dimension_numbers = #tpu.dot_dimension_numbers<[1], [1], [0], [0], [0, 0, 1, 0], [], []>} : vector<8x32xf32>, vector<8x32xf32>, vector<8x8xf32> -> vector<8x8xf32>
      %14 = tpu.iota {dimensions = array<i32: 0>} : vector<8x8xi32>
      %15 = vector.broadcast %0 : i32 to vector<8x8xi32>
      %16 = arith.addi %15, %14 : vector<8x8xi32>
      %17 = tpu.iota {dimensions = array<i32: 1>} : vector<8x8xi32>
      %18 = vector.broadcast %1 : i32 to vector<8x8xi32>
      %19 = arith.addi %18, %17 : vector<8x8xi32>
      %c0_7 = arith.constant 0 : index
      %c0_8 = arith.constant 0 : index
      %c0_9 = arith.constant 0 : index
      %20 = vector.load %arg5[%c0_7, %c0_8, %c0_9] : memref<1x8x1xf32, #tpu.memory_space<vmem>>, vector<1x8x1xf32>
      %21 = vector.shape_cast %20 : vector<1x8x1xf32> to vector<8x1xf32>
      %cst_10 = arith.constant 5.000000e-01 : f32
      %22 = vector.broadcast %cst_10 : f32 to vector<8x1xf32>
      %23 = arith.cmpf ogt, %21, %22 : vector<8x1xf32>
      %c0_11 = arith.constant 0 : index
      %c0_12 = arith.constant 0 : index
      %c0_13 = arith.constant 0 : index
      %24 = vector.load %arg6[%c0_11, %c0_12, %c0_13] : memref<1x1x8xf32, #tpu.memory_space<vmem>>, vector<1x1x8xf32>
      %25 = vector.shape_cast %24 : vector<1x1x8xf32> to vector<1x8xf32>
      %cst_14 = arith.constant 5.000000e-01 : f32
      %26 = vector.broadcast %cst_14 : f32 to vector<1x8xf32>
      %27 = arith.cmpf ogt, %25, %26 : vector<1x8xf32>
      %28 = arith.cmpi sge, %19, %16 : vector<8x8xi32>
      %29 = vector.broadcast %23 : vector<8x1xi1> to vector<8x8xi1>
      %30 = arith.andi %28, %29 : vector<8x8xi1>
      %31 = vector.broadcast %27 : vector<1x8xi1> to vector<8x8xi1>
      %32 = arith.andi %30, %31 : vector<8x8xi1>
      %cst_15 = arith.constant -1.000000e+09 : f32
      %33 = vector.broadcast %cst_15 : f32 to vector<8x8xf32>
      %34 = arith.select %32, %13, %33 : vector<8x8xi1>, vector<8x8xf32>
      %c0_16 = arith.constant 0 : index
      %c0_17 = arith.constant 0 : index
      %c0_18 = arith.constant 0 : index
      %35 = vector.load %arg7[%c0_16, %c0_17, %c0_18] : memref<1x8x8xf32, #tpu.memory_space<vmem>>, vector<1x8x8xf32>
      %36 = vector.shape_cast %35 : vector<1x8x8xf32> to vector<8x8xf32>
      %37 = vector.shape_cast %34 : vector<8x8xf32> to vector<1x8x8xf32>
      tpu.vector_store %arg7[%c0_16, %c0_17, %c0_18], %37 {strides = array<i32>} : memref<1x8x8xf32, #tpu.memory_space<vmem>>, vector<1x8x8xf32>,
    } else {
    }
    %true = arith.constant true
    %6 = arith.xori %3, %true : i1
    %7 = arith.extui %6 : i1 to i32
    %c0_i32_1 = arith.constant 0 : i32
    %8 = arith.cmpi ne, %7, %c0_i32_1 : i32
    scf.if %8 {
      %cst = arith.constant -1.000000e+09 : f32
      %9 = vector.broadcast %cst : f32 to vector<8x8xf32>
      %c0 = arith.constant 0 : index
      %c0_2 = arith.constant 0 : index
      %c0_3 = arith.constant 0 : index
      %10 = vector.load %arg7[%c0, %c0_2, %c0_3] : memref<1x8x8xf32, #tpu.memory_space<vmem>>, vector<1x8x8xf32>
      %11 = vector.shape_cast %10 : vector<1x8x8xf32> to vector<8x8xf32>
      %12 = vector.shape_cast %9 : vector<8x8xf32> to vector<1x8x8xf32>
      tpu.vector_store %arg7[%c0, %c0_2, %c0_3], %12 {strides = array<i32>} : memref<1x8x8xf32, #tpu.memory_space<vmem>>, vector<1x8x8xf32>,
    } else {
    }
    return
  }
  func.func @transform_0(%arg0: i32, %arg1: i32, %arg2: i32) -> (i32, i32, i32) {
    %c0_i32 = arith.constant 0 : i32
    %c0_i32_0 = arith.constant 0 : i32
    return %arg0, %arg1, %c0_i32 : i32, i32, i32
  }
  func.func @transform_1(%arg0: i32, %arg1: i32, %arg2: i32) -> (i32, i32, i32) {
    %c0_i32 = arith.constant 0 : i32
    %c0_i32_0 = arith.constant 0 : i32
    return %arg0, %arg2, %c0_i32 : i32, i32, i32
  }
  func.func @transform_2(%arg0: i32, %arg1: i32, %arg2: i32) -> (i32, i32, i32) {
    %c0_i32 = arith.constant 0 : i32
    %c0_i32_0 = arith.constant 0 : i32
    return %arg0, %arg1, %c0_i32 : i32, i32, i32
  }
  func.func @transform_3(%arg0: i32, %arg1: i32, %arg2: i32) -> (i32, i32, i32) {
    %c0_i32 = arith.constant 0 : i32
    %c0_i32_0 = arith.constant 0 : i32
    return %arg0, %c0_i32, %arg2 : i32, i32, i32
  }
  func.func @transform_4(%arg0: i32, %arg1: i32, %arg2: i32) -> (i32, i32, i32) {
    %c0_i32 = arith.constant 0 : i32
    return %arg0, %arg1, %arg2 : i32, i32, i32
  }
}

</mosaic_0001>

<llo_original>
// kernel: tpu_custom_call.1
$region0: #{tpu_custom_call.1}
  #allocation0 [shape = 'u32[]', space=smem, size = 0x4, offset = 0x4, fixed_abs, tag = 'smem constant byte address 0x4 - core index']
  #allocation1 [shape = 'u32[144,128]{1,0:T(1,128)}', space=vmem, size = 0x12000, scoped, tag = 'internal scratch']
  %s0 = inlined_call_operand.vmem [shape: f32[2,8,32], index: 0, kind: input, shape index: {}]
  %s1 = inlined_call_operand.hbm [shape: f32[2,8,32], index: 1, kind: input, shape index: {}]
  %s2 = inlined_call_operand.vmem [shape: f32[2,8,1], index: 2, kind: input, shape index: {}]
  %s3 = inlined_call_operand.vmem [shape: f32[2,1,8], index: 3, kind: input, shape index: {}]
  %s4 = inlined_call_operand.hbm [shape: f32[2,8,8], index: 4, kind: output, shape index: {}]
  %s5 = sld [smem:[#allocation0]]
  $region61: #{tpu_custom_call.1} parent=0
    _
  %s7 = ssub.s32 1, %s5
  %s8 = scalar_select 0, %s7, %s5
  $region1: #{tpu_custom_call.1} parent=0
    #allocation2 [shape = 'u8[8192]{0}', space=vmem, size = 0x2000, scoped, tag = 'input window, operand 1']
    #allocation3 [shape = 's32[2]{0}', space=sflag, size = 0x8, scoped, tag = 'scoped memory for tpu_custom_call.1']
    #allocation4 [shape = 's32[2]{0}', space=sflag, size = 0x8, scoped, tag = 'scoped memory for tpu_custom_call.1']
    #allocation5 [shape = 'u8[8192]{0}', space=vmem, size = 0x2000, scoped, tag = 'output window, operand 0']
    %9 = vsyncpa [#allocation3], 0
    %s10 = scalar_lea.sflag [#allocation3], 1
    %11 = vsyncpa %s10, 0
    %12 = vsyncpa [#allocation4], 0
    %s13 = scalar_lea.sflag [#allocation4], 1
    %14 = vsyncpa %s13, 0
    loop: start=0, step=1, limit=4
    $region2: #{tpu_custom_call.1} parent=1 // loop_pre_header
      _
    $region3: #{tpu_custom_call.1} parent=1 // loop_header
      %s16 = sphi 0, %s20
      %p17 = scmp.ge.s32.totalorder %s16, 4
      %s23 = sphi 0, %s42
      %s24 = sphi 0, %s38
      %s25 = sphi 0, %s34
      %s26 = sphi 0, %s23
      %s27 = sphi 0, %s24
      %s28 = sphi 0, %s25
      %s29 = sphi 0, %s26
      %s30 = sphi 0, %s27
      %s31 = sphi 0, %s28
      %s47 = sphi 0, %s49
      %s50 = sphi 0, %s47
      %s51 = sphi 0, %s50
      %s67 = sphi 0, %s51
      %s75 = sphi 0, %s77
      %s78 = sphi 0, %s75
      %s79 = sphi 0, %s78
      %s95 = sphi 0, %s79
      %s103 = sphi 0, %s105
      %s106 = sphi 0, %s103
      %s107 = sphi 0, %s106
      %s123 = sphi 0, %s107
      %s131 = sphi 0, %s133
      %s134 = sphi 0, %s131
      %s135 = sphi 0, %s134
      %s151 = sphi 0, %s135
      %s161 = sphi 0, %s163
      %s164 = sphi 0, %s161
      %s165 = sphi 0, %s164
      %s181 = sphi 0, %s165
    $region4: #{tpu_custom_call.1} parent=1 // loop_header_branch
      %19 = sbr.rel (%p17) target = $region8
    $region5: #{tpu_custom_call.1} parent=1 // loop_body
      %s21 = ssub.s32 %s16, 1
      %s22 = ssub.s32 %s16, 2
      %s32 = sadd.s32 1, %s25
      %p33 = scmp.ge.s32.totalorder %s32, 1
      %s34 = scalar_select %p33, 0, %s32
      %s35 = sadd.s32 1, %s24
      %s36 = scalar_select %p33, %s35, %s24
      %p37 = scmp.ge.s32.totalorder %s36, 1
      %s38 = scalar_select %p37, 0, %s36
      %s39 = sadd.s32 1, %s23
      %s40 = scalar_select %p37, %s39, %s23
      %p41 = scmp.ge.s32.totalorder %s40, 2
      %s42 = scalar_select %p41, 0, %s40
      %s43 = ssub.s32 %s23, %s42
      %s44 = ssub.s32 %s24, %s38
      %s45 = sor.u32 %s43, %s44
      %p46 = scmp.eq.s32.totalorder %s45, 0
      %s48 = sadd.s32 %s47, 1
      %s49 = scalar_select %p46, %s47, %s48
      %p52 = pneg %p46
      %p53 = scmp.eq.s32.totalorder %s16, 1
      %p54 = por %p52, %p53
      %p55 = scmp.ne.s32.totalorder %s47, %s50
      %p56 = scmp.eq.s32.totalorder %s16, 0
      %p57 = por %p55, %p56
      %p58 = scmp.ne.s32.totalorder %s47, %s50
      %p59 = scmp.eq.s32.totalorder %s21, 1
      %p60 = por %p58, %p59
      %p61 = scmp.ne.s32.totalorder %s50, %s51
      %p62 = scmp.eq.s32.totalorder %s21, 0
      %p63 = por %p61, %p62
      %p64 = scmp.ne.s32.totalorder %s50, %s51
      %p65 = scmp.eq.s32.totalorder %s22, 1
      %p66 = por %p64, %p65
      %p68 = scmp.ne.s32.totalorder %s51, %s67
      %p69 = scmp.eq.s32.totalorder %s22, 0
      %p70 = por %p68, %p69
      %s71 = ssub.s32 %s23, %s42
      %s72 = ssub.s32 %s25, %s34
      %s73 = sor.u32 %s71, %s72
      %p74 = scmp.eq.s32.totalorder %s73, 0
      %s76 = sadd.s32 %s75, 1
      %s77 = scalar_select %p74, %s75, %s76
      %p80 = pneg %p74
      %p81 = scmp.eq.s32.totalorder %s16, 1
      %p82 = por %p80, %p81
      %p83 = scmp.ne.s32.totalorder %s75, %s78
      %p84 = scmp.eq.s32.totalorder %s16, 0
      %p85 = por %p83, %p84
      %p86 = scmp.ne.s32.totalorder %s75, %s78
      %p87 = scmp.eq.s32.totalorder %s21, 1
      %p88 = por %p86, %p87
      %p89 = scmp.ne.s32.totalorder %s78, %s79
      %p90 = scmp.eq.s32.totalorder %s21, 0
      %p91 = por %p89, %p90
      %p92 = scmp.ne.s32.totalorder %s78, %s79
      %p93 = scmp.eq.s32.totalorder %s22, 1
      %p94 = por %p92, %p93
      %p96 = scmp.ne.s32.totalorder %s79, %s95
      %p97 = scmp.eq.s32.totalorder %s22, 0
      %p98 = por %p96, %p97
      %s99 = ssub.s32 %s23, %s42
      %s100 = ssub.s32 %s24, %s38
      %s101 = sor.u32 %s99, %s100
      %p102 = scmp.eq.s32.totalorder %s101, 0
      %s104 = sadd.s32 %s103, 1
      %s105 = scalar_select %p102, %s103, %s104
      %p108 = pneg %p102
      %p109 = scmp.eq.s32.totalorder %s16, 1
      %p110 = por %p108, %p109
      %p111 = scmp.ne.s32.totalorder %s103, %s106
      %p112 = scmp.eq.s32.totalorder %s16, 0
      %p113 = por %p111, %p112
      %p114 = scmp.ne.s32.totalorder %s103, %s106
      %p115 = scmp.eq.s32.totalorder %s21, 1
      %p116 = por %p114, %p115
      %p117 = scmp.ne.s32.totalorder %s106, %s107
      %p118 = scmp.eq.s32.totalorder %s21, 0
      %p119 = por %p117, %p118
      %p120 = scmp.ne.s32.totalorder %s106, %s107
      %p121 = scmp.eq.s32.totalorder %s22, 1
      %p122 = por %p120, %p121
      %p124 = scmp.ne.s32.totalorder %s107, %s123
      %p125 = scmp.eq.s32.totalorder %s22, 0
      %p126 = por %p124, %p125
      %s127 = ssub.s32 %s23, %s42
      %s128 = ssub.s32 %s25, %s34
      %s129 = sor.u32 %s127, %s128
      %p130 = scmp.eq.s32.totalorder %s129, 0
      %s132 = sadd.s32 %s131, 1
      %s133 = scalar_select %p130, %s131, %s132
      %p136 = pneg %p130
      %p137 = scmp.eq.s32.totalorder %s16, 1
      %p138 = por %p136, %p137
      %p139 = scmp.ne.s32.totalorder %s131, %s134
      %p140 = scmp.eq.s32.totalorder %s16, 0
      %p141 = por %p139, %p140
      %p142 = scmp.ne.s32.totalorder %s131, %s134
      %p143 = scmp.eq.s32.totalorder %s21, 1
      %p144 = por %p142, %p143
      %p145 = scmp.ne.s32.totalorder %s134, %s135
      %p146 = scmp.eq.s32.totalorder %s21, 0
      %p147 = por %p145, %p146
      %p148 = scmp.ne.s32.totalorder %s134, %s135
      %p149 = scmp.eq.s32.totalorder %s22, 1
      %p150 = por %p148, %p149
      %p152 = scmp.ne.s32.totalorder %s135, %s151
      %p153 = scmp.eq.s32.totalorder %s22, 0
      %p154 = por %p152, %p153
      %s155 = ssub.s32 %s23, %s42
      %s156 = ssub.s32 %s24, %s38
      %s157 = sor.u32 %s155, %s156
      %s158 = ssub.s32 %s25, %s34
      %s159 = sor.u32 %s157, %s158
      %p160 = scmp.eq.s32.totalorder %s159, 0
      %s162 = sadd.s32 %s161, 1
      %s163 = scalar_select %p160, %s161, %s162
      %p166 = pneg %p160
      %p167 = scmp.eq.s32.totalorder %s16, 1
      %p168 = por %p166, %p167
      %p169 = scmp.ne.s32.totalorder %s161, %s164
      %p170 = scmp.eq.s32.totalorder %s16, 0
      %p171 = por %p169, %p170
      %p172 = scmp.ne.s32.totalorder %s161, %s164
      %p173 = scmp.eq.s32.totalorder %s21, 1
      %p174 = por %p172, %p173
      %p175 = scmp.ne.s32.totalorder %s164, %s165
      %p176 = scmp.eq.s32.totalorder %s21, 0
      %p177 = por %p175, %p176
      %p178 = scmp.ne.s32.totalorder %s164, %s165
      %p179 = scmp.eq.s32.totalorder %s22, 1
      %p180 = por %p178, %p179
      %p182 = scmp.ne.s32.totalorder %s165, %s181
      %p183 = scmp.eq.s32.totalorder %s22, 0
      %p184 = por %p182, %p183
      %p185 = scmp.le.s32.totalorder 1, %s16
      %p186 = scmp.lt.s32.totalorder %s16, 3
      %p187 = pnand %p185, %p186
      %p188 = pneg %p187
      // Predicated region
      $region9: #{tpu_custom_call.1} parent=5 // pred_check
        _
      $region10: #{tpu_custom_call.1} parent=5 // pred_check_branch
        %190 = sbr.rel (%p187) target = $region12
      $region11: #{tpu_custom_call.1} parent=5 // pred_region
        %s191 = ssub.s32 %s16, 1
      $region12: #{tpu_custom_call.1} parent=5 // pred_fallthru
        _
      %p192 = scmp.lt.s32.totalorder %s16, 2
      // Predicated region
      $region13: #{tpu_custom_call.1} parent=5 // pred_check
        %p193 = pneg %p192
      $region14: #{tpu_custom_call.1} parent=5 // pred_check_branch
        %195 = sbr.rel (%p193) target = $region16
      $region15: #{tpu_custom_call.1} parent=5 // pred_region
        // Predicated region
        $region17: #{tpu_custom_call.1} parent=15 // pred_check
          %p196 = pneg %p57
        $region18: #{tpu_custom_call.1} parent=15 // pred_check_branch
          %198 = sbr.rel (%p196) target = $region20
        $region19: #{tpu_custom_call.1} parent=15 // pred_region
          %p199 = scmp.lt.s32.totalorder %s23, 1
          %s200 = scalar_select %p199, %s23, 1
          %p201 = scmp.lt.s32.totalorder %s24, 0
          %s202 = scalar_select %p201, %s24, 0
          %s203 = sadd.s32 %s202, %s200
          %s204 = smul.addr %s203, 8
          %s205 = scalar_lea.vmem %s0, %s204
        $region20: #{tpu_custom_call.1} parent=15 // pred_fallthru
          _
        // Predicated region
        $region21: #{tpu_custom_call.1} parent=15 // pred_check
          %p206 = pneg %p85
        $region22: #{tpu_custom_call.1} parent=15 // pred_check_branch
          %208 = sbr.rel (%p206) target = $region24
        $region23: #{tpu_custom_call.1} parent=15 // pred_region
          %s209 = sand.u32 %s75, 1
          %s210 = scalar_lea.sflag [#allocation3], %s209
          %s211 = sand.u32 %s75, 1
          %s212 = smul.addr %s211, 8
          %s213 = scalar_lea.vmem [#allocation2], %s212
          %s215 = ssub.s32 128, 128
          %216 = vsyncadd %s210, %s215
          %s217 = sadd.s32 %s25, %s23
          %s218 = smul.addr %s217, 128
          %s219 = scalar_lea.hbm %s1, %s218
          %s221 = sshll.u32 %s213, 4
          %s222 = int_to_ptr.vmem [resolvable:$true] %s221
          %224 = dma.hbm_to_vmem [thread:$0]  %s219, 128, %s222, %s210
        $region24: #{tpu_custom_call.1} parent=15 // pred_fallthru
          _
        // Predicated region
        $region25: #{tpu_custom_call.1} parent=15 // pred_check
          %p225 = pneg %p113
        $region26: #{tpu_custom_call.1} parent=15 // pred_check_branch
          %227 = sbr.rel (%p225) target = $region28
        $region27: #{tpu_custom_call.1} parent=15 // pred_region
          %p228 = scmp.lt.s32.totalorder %s23, 1
          %s229 = scalar_select %p228, %s23, 1
          %p230 = scmp.lt.s32.totalorder %s24, 0
          %s231 = scalar_select %p230, %s24, 0
          %s232 = sadd.s32 %s231, %s229
          %s233 = smul.addr %s232, 8
          %s234 = scalar_lea.vmem %s2, %s233
        $region28: #{tpu_custom_call.1} parent=15 // pred_fallthru
          _
        // Predicated region
        $region29: #{tpu_custom_call.1} parent=15 // pred_check
          %p235 = pneg %p141
        $region30: #{tpu_custom_call.1} parent=15 // pred_check_branch
          %237 = sbr.rel (%p235) target = $region32
        $region31: #{tpu_custom_call.1} parent=15 // pred_region
          %p238 = scmp.lt.s32.totalorder %s23, 1
          %s239 = scalar_select %p238, %s23, 1
          %p240 = scmp.lt.s32.totalorder %s25, 0
          %s241 = scalar_select %p240, %s25, 0
          %s242 = sadd.s32 %s241, %s239
          %s243 = scalar_lea.vmem %s3, %s242
        $region32: #{tpu_custom_call.1} parent=15 // pred_fallthru
          _
      $region16: #{tpu_custom_call.1} parent=5 // pred_fallthru
        _
      %p244 = scmp.le.s32.totalorder 1, %s16
      %p245 = scmp.lt.s32.totalorder %s16, 3
      %p246 = pnand %p244, %p245
      %p247 = pneg %p246
      // Predicated region
      $region33: #{tpu_custom_call.1} parent=5 // pred_check
        _
      $region34: #{tpu_custom_call.1} parent=5 // pred_check_branch
        %249 = sbr.rel (%p246) target = $region36
      $region35: #{tpu_custom_call.1} parent=5 // pred_region
        %s250 = ssub.s32 %s16, 1
        %s251 = sand.u32 %s78, 1
        %s252 = scalar_lea.sflag [#allocation3], %s251
        %s253 = sand.u32 %s78, 1
        %s254 = smul.addr %s253, 8
        %s255 = scalar_lea.vmem [#allocation2], %s254
        // Predicated region
        $region37: #{tpu_custom_call.1} parent=35 // pred_check
          %p256 = pneg %p91
        $region38: #{tpu_custom_call.1} parent=35 // pred_check_branch
          %258 = sbr.rel (%p256) target = $region40
        $region39: #{tpu_custom_call.1} parent=35 // pred_region
          %259 = dma.done %s252, 128
        $region40: #{tpu_custom_call.1} parent=35 // pred_fallthru
          _
        %p260 = scmp.lt.s32.totalorder %s26, 1
        %s261 = scalar_select %p260, %s26, 1
        %p262 = scmp.lt.s32.totalorder %s27, 0
        %s263 = scalar_select %p262, %s27, 0
        %s264 = sadd.s32 %s263, %s261
        %s265 = smul.addr %s264, 8
        %s266 = scalar_lea.vmem %s0, %s265
        %p267 = pneg %p63
        %p268 = pneg %p60
        %s269 = sand.u32 %s78, 1
        %s270 = scalar_lea.sflag [#allocation3], %s269
        %s271 = sand.u32 %s78, 1
        %s272 = smul.addr %s271, 8
        %s273 = scalar_lea.vmem [#allocation2], %s272
        %p274 = pneg %p91
        %p275 = pneg %p88
        %p276 = scmp.lt.s32.totalorder %s26, 1
        %s277 = scalar_select %p276, %s26, 1
        %p278 = scmp.lt.s32.totalorder %s27, 0
        %s279 = scalar_select %p278, %s27, 0
        %s280 = sadd.s32 %s279, %s277
        %s281 = smul.addr %s280, 8
        %s282 = scalar_lea.vmem %s2, %s281
        %p283 = pneg %p119
        %p284 = pneg %p116
        %p285 = scmp.lt.s32.totalorder %s26, 1
        %s286 = scalar_select %p285, %s26, 1
        %p287 = scmp.lt.s32.totalorder %s28, 0
        %s288 = scalar_select %p287, %s28, 0
        %s289 = sadd.s32 %s288, %s286
        %s290 = scalar_lea.vmem %s3, %s289
        %p291 = pneg %p147
        %p292 = pneg %p144
        %p293 = pneg %p177
        %p294 = pneg %p174
        %s295 = sand.u32 %s164, 1
        %s296 = scalar_lea.sflag [#allocation4], %s295
        %s297 = sand.u32 %s164, 1
        %s298 = smul.addr %s297, 8
        %s299 = scalar_lea.vmem [#allocation5], %s298
        %p300 = scmp.lt.s32.totalorder %s26, 1
        %s301 = scalar_select %p300, %s26, 1
        %p302 = scmp.lt.s32.totalorder %s27, 0
        %s303 = scalar_select %p302, %s27, 0
        %s304 = sadd.s32 %s303, %s301
        %s305 = smul.addr %s304, 8
        %s306 = scalar_lea.vmem %s0, %s305
        %p307 = scmp.lt.s32.totalorder %s26, 1
        %s308 = scalar_select %p307, %s26, 1
        %p309 = scmp.lt.s32.totalorder %s27, 0
        %s310 = scalar_select %p309, %s27, 0
        %s311 = sadd.s32 %s310, %s308
        %s312 = smul.addr %s311, 8
        %s313 = scalar_lea.vmem %s2, %s312
        %p314 = scmp.lt.s32.totalorder %s26, 1
        %s315 = scalar_select %p314, %s26, 1
        %p316 = scmp.lt.s32.totalorder %s28, 0
        %s317 = scalar_select %p316, %s28, 0
        %s318 = sadd.s32 %s317, %s315
        %s319 = scalar_lea.vmem %s3, %s318
        %s320 = smul.u32 %s27, 8
        %s321 = smul.u32 %s28, 8
        %s322 = sadd.s32 %s321, 7
        %p323 = scmp.ge.s32.totalorder %s322, %s320
        // Predicated region
        $region41: #{tpu_custom_call.1} parent=35 // pred_check
          %p324 = pneg %p323
        $region42: #{tpu_custom_call.1} parent=35 // pred_check_branch
          %326 = sbr.rel (%p324) target = $region44
        $region43: #{tpu_custom_call.1} parent=35 // pred_region
          %v327 = vld [vmem:[%s306] sm:$0xff]
          %v328 = vld [vmem:[%s255] sm:$0xff]
          %vm329 = vcmask 261120
          %v331 = vsel %vm329, %v327, 0
          %v334 = vsel %vm329, %v328, 0
          %336 = vmatprep.subr.mxu0 0.0
          %337 = vmatpush1.xpose.msra.mxu0 %v334
          %338 = vmatprep.subr.mxu0 0.0
          %339 = vmatpush1.xpose.msra.mxu0 0.0
          %340 = vmatprep.subr.mxu0 0.0
          %341 = vmatpush1.xpose.msra.mxu0 0.0
          %342 = vmatprep.subr.mxu0 0.0
          %343 = vmatpush1.xpose.msra.mxu0 0.0
          %344 = vmatprep.subr.mxu0 0.0
          %345 = vmatpush1.xpose.msra.mxu0 0.0
          %346 = vmatprep.subr.mxu0 0.0
          %347 = vmatpush1.xpose.msra.mxu0 0.0
          %348 = vmatprep.subr.mxu0 0.0
          %349 = vmatpush1.xpose.msra.mxu0 0.0
          %350 = vmatprep.subr.mxu0 0.0
          %351 = vmatpush1.xpose.msra.mxu0 0.0
          %352 = vmatprep.subr.mxu0 0.0
          %353 = vmatpush1.xpose.msra.mxu0 0.0
          %354 = vmatprep.subr.mxu0 0.0
          %355 = vmatpush1.xpose.msra.mxu0 0.0
          %356 = vmatprep.subr.mxu0 0.0
          %357 = vmatpush1.xpose.msra.mxu0 0.0
          %358 = vmatprep.subr.mxu0 0.0
          %359 = vmatpush1.xpose.msra.mxu0 0.0
          %360 = vmatprep.subr.mxu0 0.0
          %361 = vmatpush1.xpose.msra.mxu0 0.0
          %362 = vmatprep.subr.mxu0 0.0
          %363 = vmatpush1.xpose.msra.mxu0 0.0
          %364 = vmatprep.subr.mxu0 0.0
          %365 = vmatpush1.xpose.msra.mxu0 0.0
          %366 = vmatprep.subr.mxu0 0.0
          %367 = vmatpush1.xpose.msra.mxu0 0.0
          %368 = vmatprep.subr.mxu0 0.0
          %369 = vmatpush1.xpose.msra.mxu0 0.0
          %370 = vmatprep.subr.mxu0 0.0
          %371 = vmatpush1.xpose.msra.mxu0 0.0
          %372 = vmatprep.subr.mxu0 0.0
          %373 = vmatpush1.xpose.msra.mxu0 0.0
          %374 = vmatprep.subr.mxu0 0.0
          %375 = vmatpush1.xpose.msra.mxu0 0.0
          %376 = vmatprep.subr.mxu0 0.0
          %377 = vmatpush1.xpose.msra.mxu0 0.0
          %378 = vmatprep.subr.mxu0 0.0
          %379 = vmatpush1.xpose.msra.mxu0 0.0
          %380 = vmatprep.subr.mxu0 0.0
          %381 = vmatpush1.xpose.msra.mxu0 0.0
          %382 = vmatprep.subr.mxu0 0.0
          %383 = vmatpush1.xpose.msra.mxu0 0.0
          %384 = vmatprep.subr.mxu0 0.0
          %385 = vmatpush1.xpose.msra.mxu0 0.0
          %386 = vmatprep.subr.mxu0 0.0
          %387 = vmatpush1.xpose.msra.mxu0 0.0
          %388 = vmatprep.subr.mxu0 0.0
          %389 = vmatpush1.xpose.msra.mxu0 0.0
          %390 = vmatprep.subr.mxu0 0.0
          %391 = vmatpush1.xpose.msra.mxu0 0.0
          %392 = vmatprep.subr.mxu0 0.0
          %393 = vmatpush1.xpose.msra.mxu0 0.0
          %394 = vmatprep.subr.mxu0 0.0
          %395 = vmatpush1.xpose.msra.mxu0 0.0
          %396 = vmatprep.subr.mxu0 0.0
          %397 = vmatpush1.xpose.msra.mxu0 0.0
          %398 = vmatprep.subr.mxu0 0.0
          %399 = vmatpush1.xpose.msra.mxu0 0.0
          %400 = vmatprep.mubr.f32.mxu0 0.0
          %401 = vmatmul.mubr.f32.gmra.mrb[0].mxu0 %v331
          %v402 = vpop.f32.mrb[0].mxu0
          %v403 = vadd.f32 0.0, %v402
          %v404 = vpop.f32.mrb[0].mxu0
          %405 = vdwg.mxu0
          %v406 = vlaneseq
          %v407 = vshrl.u32 %v406, 7
          %v408 = vstv %s320
          %v409 = vadd.s32 %v408, %v407
          %v410 = vlaneseq
          %v411 = vand.u32 %v410, 127
          %v412 = vstv %s321
          %v413 = vadd.s32 %v412, %v411
          %v414 = vld [vmem:[%s313] sm:$0xff]
          %vm415 = vcmp.gt.f32.partialorder %v414, 0.5
          %v416 = vld [vmem:[%s319] sm:$0x1]
          %vm417 = vcmp.gt.f32.partialorder %v416, 0.5
          %vm418 = vcmp.ge.s32.totalorder %v413, %v409
          %v419 = vsel %vm415, 1, 0
          %420 = vset.pattern.permute.xlu0 0
          %421 = vperm.xlu0 %420, %v419
          %v422 = vpop.permute.xlu0 %421
          %vm423 = vcmp.eq.s32.totalorder %v422, 1
          %vm424 = vmand %vm418, %vm423
          %v425 = vsel %vm417, 1, 0
          %v426 = vlaneseq
          %v427 = vshrl.u32 %v426, 7
          %v428 = vsub.s32 0, %v427
          %v429 = vrot.slane %v425, %v428
          %vm430 = vcmp.eq.s32.totalorder %v429, 1
          %vm431 = vmand %vm424, %vm430
          %v432 = vsel %vm431, %v403, -1e+09
          %vm433 = vcmask 64512
          %434 = vst.msk [vmem:[%s299] sm:$0xff] %vm433, %v432
        $region44: #{tpu_custom_call.1} parent=35 // pred_fallthru
          _
        %p435 = scmp.lt.s32.totalorder %s322, %s320
        // Predicated region
        $region45: #{tpu_custom_call.1} parent=35 // pred_check
          %p436 = pneg %p435
        $region46: #{tpu_custom_call.1} parent=35 // pred_check_branch
          %438 = sbr.rel (%p436) target = $region48
        $region47: #{tpu_custom_call.1} parent=35 // pred_region
          %vm439 = vcmask 64512
          %440 = vst.msk [vmem:[%s299] sm:$0xff] %vm439, -1e+09
        $region48: #{tpu_custom_call.1} parent=35 // pred_fallthru
          _
        %s441 = sand.u32 %s164, 1
        %s442 = scalar_lea.sflag [#allocation4], %s441
        %s443 = sand.u32 %s164, 1
        %s444 = smul.addr %s443, 8
        %s445 = scalar_lea.vmem [#allocation5], %s444
        // Predicated region
        $region49: #{tpu_custom_call.1} parent=35 // pred_check
          %p446 = pneg %p174
        $region50: #{tpu_custom_call.1} parent=35 // pred_check_branch
          %448 = sbr.rel (%p446) target = $region52
        $region51: #{tpu_custom_call.1} parent=35 // pred_region
          %s450 = ssub.s32 128, 128
          %451 = vsyncadd %s442, %s450
          %s452 = sadd.s32 %s28, %s27
          %s453 = sadd.s32 %s452, %s26
          %s454 = smul.addr %s453, 128
          %s455 = scalar_lea.hbm %s4, %s454
          %s457 = sshll.u32 %s445, 4
          %s458 = int_to_ptr.vmem [resolvable:$true] %s457
          %460 = dma.vmem_to_hbm [thread:$0]  %s458, 128, %s455, %s442
        $region52: #{tpu_custom_call.1} parent=35 // pred_fallthru
          _
      $region36: #{tpu_custom_call.1} parent=5 // pred_fallthru
        _
      %p461 = scmp.le.s32.totalorder 2, %s16
      // Predicated region
      $region53: #{tpu_custom_call.1} parent=5 // pred_check
        %p462 = pneg %p461
      $region54: #{tpu_custom_call.1} parent=5 // pred_check_branch
        %464 = sbr.rel (%p462) target = $region56
      $region55: #{tpu_custom_call.1} parent=5 // pred_region
        %s465 = ssub.s32 %s16, 2
        // Predicated region
        $region57: #{tpu_custom_call.1} parent=55 // pred_check
          %p466 = pneg %p180
        $region58: #{tpu_custom_call.1} parent=55 // pred_check_branch
          %468 = sbr.rel (%p466) target = $region60
        $region59: #{tpu_custom_call.1} parent=55 // pred_region
          %s469 = sand.u32 %s165, 1
          %s470 = scalar_lea.sflag [#allocation4], %s469
          %s471 = sand.u32 %s165, 1
          %s472 = smul.addr %s471, 8
          %s473 = scalar_lea.vmem [#allocation5], %s472
          %474 = dma.done %s470, 128
        $region60: #{tpu_custom_call.1} parent=55 // pred_fallthru
          _
      $region56: #{tpu_custom_call.1} parent=5 // pred_fallthru
        _
    $region6: #{tpu_custom_call.1} parent=1 // loop_footer
      %s20 = sadd.s32 1, %s16
    $region7: #{tpu_custom_call.1} parent=1 // loop_footer_branch
      %15 = sbr.rel target = $region3
    $region8: #{tpu_custom_call.1} parent=1 // loop_exit
      _
    %475 = vsyncpa [#allocation3], 1
    %s476 = scalar_lea.sflag [#allocation3], 1
    %477 = vsyncpa %s476, 1
    %478 = vsyncpa [#allocation4], 1
    %s479 = scalar_lea.sflag [#allocation4], 1
    %480 = vsyncpa %s479, 1

</llo_original>
